<compile_context>
chip_gen: v7x
topology: tpu7x:2x2x1
jax: 0.10.0
libtpu: 0.0.40
codegen_flags: <defaults>
</compile_context>

<pallas_src>
import jax
import jax.numpy as jnp
from jax import lax
from jax.experimental import pallas as pl
from jax.experimental.pallas import tpu as pltpu


def _leaky_relu(x, slope=0.2):
    return jnp.where(x > 0, x, slope * x)


def discriminator_kernel(x_ref, w1_ref, b1_ref, w2_ref, b2_ref, w3_ref, b3_ref,
                         out_ref):
    # x tile: (tile_b, 128) f32 streamed from HBM; cast to bf16 on the VPU.
    x = x_ref[...].astype(jnp.bfloat16)

    # Linear(128 -> 256): bf16 operands, f32 accumulation on the MXU.
    h1 = jnp.dot(x, w1_ref[...], preferred_element_type=jnp.float32)
    # Bias + LeakyReLU + bf16 downcast fused in one epilogue.
    h1 = _leaky_relu(h1 + b1_ref[...]).astype(jnp.bfloat16)     # (tile_b, 256)

    # Dropout(0.2) -> identity in eval mode.

    # Linear(256 -> 32): f32 accumulation.
    h2 = jnp.dot(h1, w2_ref[...], preferred_element_type=jnp.float32)
    h2 = _leaky_relu(h2 + b2_ref[...])                          # (tile_b, 32) f32

    # Linear(32 -> 1), emitted lane-dense: contract the 32 features against w3
    # with the *batch* dim landing in lanes:
    #     (8, 32) @ (tile_b, 32)^T -> (8, tile_b)   (rows of w3 are replicas)
    # Row 0 already has the (1, tile_b) layout of the output block, giving a
    # contiguous writeback DMA instead of a strided (tile_b, 1) store.
    s = lax.dot_general(w3_ref[...], h2,
                        dimension_numbers=(((1,), (1,)), ((), ())),
                        preferred_element_type=jnp.float32)     # (8, tile_b)
    out_ref[...] = s[0:1, :] + b3_ref[...]                      # (1, tile_b)


def _round_up(n, m):
    return ((n + m - 1) // m) * m


def discriminator_forward(x, params, *, tile_b=2048):
    """x: (B, 128) float32 -> (B, 1) float32 (eval-mode forward)."""
    w1, b1, w2, b2, w3, b3 = params
    B, D = x.shape
    assert D == 128

    # Batch tile: multiple of 128 (lane-dense output blocks), capped at half
    # the batch so the grid has >=2 steps whenever B > 128 (both v7x cores get
    # work), and capped by the caller's tile_b for VMEM.
    cap = max(128, _round_up(pl.cdiv(B, 2), 128))
    tile_b = max(128, min(_round_up(tile_b, 128), cap))
    num_tiles = pl.cdiv(B, tile_b)        # last tile may be ragged (no jnp.pad)

    # Weights / biases are tiny; pre-cast once.  Large matmul weights in bf16.
    w1b = w1.astype(jnp.bfloat16)                                # (128, 256)
    w2b = w2.astype(jnp.bfloat16)                                # (256, 32)
    b1r = b1.reshape(1, 256).astype(jnp.float32)
    b2r = b2.reshape(1, 32).astype(jnp.float32)
    # Final-layer weight as 8 replicated rows -> natural (8, 32) sublane tile.
    w3r = jnp.tile(w3.reshape(1, 32).astype(jnp.float32), (8, 1))
    b3r = b3.reshape(1, 1).astype(jnp.float32)

    const = lambda shape: pl.BlockSpec(shape, lambda i: (0, 0))

    flops = 2 * num_tiles * tile_b * (128 * 256 + 256 * 32 + 32)
    bytes_accessed = (B * 128 * x.dtype.itemsize + num_tiles * tile_b * 4
                      + w1b.size * 2 + w2b.size * 2
                      + b1r.size * 4 + b2r.size * 4 + w3r.size * 4 + 4)

    out = pl.pallas_call(
        discriminator_kernel,
        out_shape=jax.ShapeDtypeStruct((1, num_tiles * tile_b), jnp.float32),
        grid=(num_tiles,),
        in_specs=[
            pl.BlockSpec((tile_b, 128), lambda i: (i, 0)),       # x: batch-tiled
            const((128, 256)), const((1, 256)),                  # w1, b1 (resident)
            const((256, 32)), const((1, 32)),                    # w2, b2 (resident)
            const((8, 32)), const((1, 1)),                       # w3 rows, b3
        ],
        out_specs=pl.BlockSpec((1, tile_b), lambda i: (0, i)),   # lane-dense out
        compiler_params=pltpu.CompilerParams(
            dimension_semantics=("parallel",),                   # megacore on v7x
            vmem_limit_bytes=32 * 1024 * 1024),
        cost_estimate=pl.CostEstimate(
            flops=flops, bytes_accessed=bytes_accessed, transcendentals=0),
    )(x, w1b, b1r, w2b, b2r, w3r, b3r)

    # (1, num_tiles*tile_b) -> (B, 1); slice/reshape are metadata-only.
    return out[0, :B].reshape(B, 1)


def init_params(key):
    """Deterministic init mimicking PyTorch Linear default (U[-1/sqrt(fan_in), +])."""
    ks = jax.random.split(key, 6)

    def linear(kw, kb, fan_in, fan_out):
        bound = 1.0 / jnp.sqrt(fan_in)
        w = jax.random.uniform(kw, (fan_in, fan_out), jnp.float32, -bound, bound)
        b = jax.random.uniform(kb, (1, fan_out), jnp.float32, -bound, bound)
        return w, b

    w1, b1 = linear(ks[0], ks[1], 128, 256)
    w2, b2 = linear(ks[2], ks[3], 256, 32)
    w3, b3 = linear(ks[4], ks[5], 32, 1)
    return (w1, b1, w2, b2, w3, b3)


def reference(x, params):
    w1, b1, w2, b2, w3, b3 = params
    h = x @ w1 + b1
    h = jnp.where(h > 0, h, 0.2 * h)
    h = h @ w2 + b2
    h = jnp.where(h > 0, h, 0.2 * h)
    return h @ w3 + b3


if __name__ == "__main__":
    key = jax.random.PRNGKey(0)
    k_x, k_p = jax.random.split(key)
    params = init_params(k_p)

    # Small case (B=8): single partial tile (tile clamps to 128).
    x_small = jax.random.normal(k_x, (8, 128), dtype=jnp.float32)
    out_small = discriminator_forward(x_small, params)
    jax.block_until_ready(out_small)
    ref_small = reference(x_small, params)
    assert out_small.shape == (8, 1)
    # bf16 operands (f32 accumulation) -> relaxed tolerance vs f32 reference.
    assert jnp.allclose(out_small, ref_small, atol=3e-2, rtol=3e-2)

    # Ragged batch (B=300): 2-step grid with a partial last tile, no padding.
    x_big = jax.random.normal(k_x, (300, 128), dtype=jnp.float32)
    out_big = discriminator_forward(x_big, params)
    jax.block_until_ready(out_big)
    ref_big = reference(x_big, params)
    assert out_big.shape == (300, 1)
    assert jnp.allclose(out_big, ref_big, atol=3e-2, rtol=3e-2)

    print("KERNEL_OK")
</pallas_src>

<mosaic_0001>
module attributes {stable_mosaic.version = 11 : i64} {
  func.func @discriminator_kernel(%arg0: i32, %arg1: memref<128x128xf32, #tpu.memory_space<vmem>>, %arg2: memref<128x256xbf16, #tpu.memory_space<vmem>>, %arg3: memref<1x256xf32, #tpu.memory_space<vmem>>, %arg4: memref<256x32xbf16, #tpu.memory_space<vmem>>, %arg5: memref<1x32xf32, #tpu.memory_space<vmem>>, %arg6: memref<8x32xf32, #tpu.memory_space<vmem>>, %arg7: memref<1x1xf32, #tpu.memory_space<vmem>>, %arg8: memref<1x128xf32, #tpu.memory_space<vmem>>) attributes {dimension_semantics = [#tpu.dimension_semantics<parallel>], iteration_bounds = array<i64: 1>, scalar_prefetch = 0 : i64, scratch_operands = 0 : i64, tpu.core_type = #tpu.core_type<tc>, window_params = [{transform_indices = @transform_0, window_bounds = array<i64: 128, 128>}, {pipeline_mode = #tpu.pipeline_mode<synchronous>, transform_indices = @transform_1, window_bounds = array<i64: 128, 256>}, {pipeline_mode = #tpu.pipeline_mode<synchronous>, transform_indices = @transform_2, window_bounds = array<i64: 1, 256>}, {pipeline_mode = #tpu.pipeline_mode<synchronous>, transform_indices = @transform_3, window_bounds = array<i64: 256, 32>}, {pipeline_mode = #tpu.pipeline_mode<synchronous>, transform_indices = @transform_4, window_bounds = array<i64: 1, 32>}, {pipeline_mode = #tpu.pipeline_mode<synchronous>, transform_indices = @transform_5, window_bounds = array<i64: 8, 32>}, {pipeline_mode = #tpu.pipeline_mode<synchronous>, transform_indices = @transform_6, window_bounds = array<i64: 1, 1>}, {transform_indices = @transform_7, window_bounds = array<i64: 1, 128>}]} {
    %c0 = arith.constant 0 : index
    %c0_0 = arith.constant 0 : index
    %0 = vector.load %arg1[%c0, %c0_0] : memref<128x128xf32, #tpu.memory_space<vmem>>, vector<128x128xf32>
    %1 = arith.truncf %0 : vector<128x128xf32> to vector<128x128xbf16>
    %c0_1 = arith.constant 0 : index
    %c0_2 = arith.constant 0 : index
    %2 = vector.load %arg2[%c0_1, %c0_2] : memref<128x256xbf16, #tpu.memory_space<vmem>>, vector<128x256xbf16>
    %cst = arith.constant dense<0.000000e+00> : vector<128x256xf32>
    %3 = tpu.matmul %1, %2, %cst {dimension_numbers = #tpu.dot_dimension_numbers<[1], [0], [0], [1], [0, 0, 1, 1], [], []>} : vector<128x128xbf16>, vector<128x256xbf16>, vector<128x256xf32> -> vector<128x256xf32>
    %c0_3 = arith.constant 0 : index
    %c0_4 = arith.constant 0 : index
    %4 = vector.load %arg3[%c0_3, %c0_4] : memref<1x256xf32, #tpu.memory_space<vmem>>, vector<1x256xf32>
    %5 = vector.broadcast %4 : vector<1x256xf32> to vector<128x256xf32>
    %6 = arith.addf %3, %5 : vector<128x256xf32>
    %cst_5 = arith.constant 0.000000e+00 : f32
    %7 = vector.broadcast %cst_5 : f32 to vector<128x256xf32>
    %8 = arith.cmpf ogt, %6, %7 : vector<128x256xf32>
    %cst_6 = arith.constant 2.000000e-01 : f32
    %9 = vector.broadcast %cst_6 : f32 to vector<128x256xf32>
    %10 = arith.mulf %9, %6 : vector<128x256xf32>
    %11 = arith.select %8, %6, %10 : vector<128x256xi1>, vector<128x256xf32>
    %12 = arith.truncf %11 : vector<128x256xf32> to vector<128x256xbf16>
    %c0_7 = arith.constant 0 : index
    %c0_8 = arith.constant 0 : index
    %13 = vector.load %arg4[%c0_7, %c0_8] : memref<256x32xbf16, #tpu.memory_space<vmem>>, vector<256x32xbf16>
    %cst_9 = arith.constant dense<0.000000e+00> : vector<128x32xf32>
    %14 = tpu.matmul %12, %13, %cst_9 {dimension_numbers = #tpu.dot_dimension_numbers<[1], [0], [0], [1], [0, 0, 1, 1], [], []>} : vector<128x256xbf16>, vector<256x32xbf16>, vector<128x32xf32> -> vector<128x32xf32>
    %c0_10 = arith.constant 0 : index
    %c0_11 = arith.constant 0 : index
    %15 = vector.load %arg5[%c0_10, %c0_11] : memref<1x32xf32, #tpu.memory_space<vmem>>, vector<1x32xf32>
    %16 = vector.broadcast %15 : vector<1x32xf32> to vector<128x32xf32>
    %17 = arith.addf %14, %16 : vector<128x32xf32>
    %cst_12 = arith.constant 0.000000e+00 : f32
    %18 = vector.broadcast %cst_12 : f32 to vector<128x32xf32>
    %19 = arith.cmpf ogt, %17, %18 : vector<128x32xf32>
    %cst_13 = arith.constant 2.000000e-01 : f32
    %20 = vector.broadcast %cst_13 : f32 to vector<128x32xf32>
    %21 = arith.mulf %20, %17 : vector<128x32xf32>
    %22 = arith.select %19, %17, %21 : vector<128x32xi1>, vector<128x32xf32>
    %c0_14 = arith.constant 0 : index
    %c0_15 = arith.constant 0 : index
    %23 = vector.load %arg6[%c0_14, %c0_15] : memref<8x32xf32, #tpu.memory_space<vmem>>, vector<8x32xf32>
    %cst_16 = arith.constant dense<0.000000e+00> : vector<8x128xf32>
    %24 = tpu.matmul %23, %22, %cst_16 {dimension_numbers = #tpu.dot_dimension_numbers<[1], [1], [0], [0], [0, 0, 1, 0], [], []>} : vector<8x32xf32>, vector<128x32xf32>, vector<8x128xf32> -> vector<8x128xf32>
    %25 = vector.extract_strided_slice %24 {offsets = [0, 0], sizes = [1, 128], strides = [1, 1]} : vector<8x128xf32> to vector<1x128xf32>
    %c0_17 = arith.constant 0 : index
    %c0_18 = arith.constant 0 : index
    %26 = vector.load %arg7[%c0_17, %c0_18] : memref<1x1xf32, #tpu.memory_space<vmem>>, vector<1x1xf32>
    %27 = vector.broadcast %26 : vector<1x1xf32> to vector<1x128xf32>
    %28 = arith.addf %25, %27 : vector<1x128xf32>
    %c0_19 = arith.constant 0 : index
    %c0_20 = arith.constant 0 : index
    %29 = vector.load %arg8[%c0_19, %c0_20] : memref<1x128xf32, #tpu.memory_space<vmem>>, vector<1x128xf32>
    tpu.vector_store %arg8[%c0_19, %c0_20], %28 {strides = array<i32>} : memref<1x128xf32, #tpu.memory_space<vmem>>, vector<1x128xf32>,
    return
  }
  func.func @transform_0(%arg0: i32) -> (i32, i32) {
    %c0_i32 = arith.constant 0 : i32
    %c0_i32_0 = arith.constant 0 : i32
    return %arg0, %c0_i32 : i32, i32
  }
  func.func @transform_1(%arg0: i32) -> (i32, i32) {
    %c0_i32 = arith.constant 0 : i32
    %c0_i32_0 = arith.constant 0 : i32
    %c0_i32_1 = arith.constant 0 : i32
    return %c0_i32, %c0_i32_0 : i32, i32
  }
  func.func @transform_2(%arg0: i32) -> (i32, i32) {
    %c0_i32 = arith.constant 0 : i32
    %c0_i32_0 = arith.constant 0 : i32
    %c0_i32_1 = arith.constant 0 : i32
    return %c0_i32, %c0_i32_0 : i32, i32
  }
  func.func @transform_3(%arg0: i32) -> (i32, i32) {
    %c0_i32 = arith.constant 0 : i32
    %c0_i32_0 = arith.constant 0 : i32
    %c0_i32_1 = arith.constant 0 : i32
    return %c0_i32, %c0_i32_0 : i32, i32
  }
  func.func @transform_4(%arg0: i32) -> (i32, i32) {
    %c0_i32 = arith.constant 0 : i32
    %c0_i32_0 = arith.constant 0 : i32
    %c0_i32_1 = arith.constant 0 : i32
    return %c0_i32, %c0_i32_0 : i32, i32
  }
  func.func @transform_5(%arg0: i32) -> (i32, i32) {
    %c0_i32 = arith.constant 0 : i32
    %c0_i32_0 = arith.constant 0 : i32
    %c0_i32_1 = arith.constant 0 : i32
    return %c0_i32, %c0_i32_0 : i32, i32
  }
  func.func @transform_6(%arg0: i32) -> (i32, i32) {
    %c0_i32 = arith.constant 0 : i32
    %c0_i32_0 = arith.constant 0 : i32
    %c0_i32_1 = arith.constant 0 : i32
    return %c0_i32, %c0_i32_0 : i32, i32
  }
  func.func @transform_7(%arg0: i32) -> (i32, i32) {
    %c0_i32 = arith.constant 0 : i32
    %c0_i32_0 = arith.constant 0 : i32
    return %c0_i32, %arg0 : i32, i32
  }
}

</mosaic_0001>

<llo_original>
// kernel: tpu_custom_call.1
$region0: #{tpu_custom_call.1}
  #allocation0 [shape = 'u32[]', space=smem, size = 0x4, offset = 0x4, fixed_abs, tag = 'smem constant byte address 0x4 - core index']
  #allocation1 [shape = 'u32[144,128]{1,0:T(1,128)}', space=vmem, size = 0x12000, scoped, tag = 'internal scratch']
  #allocation2 [shape = 'f32[1,1]{1,0:T(1,128)S(1)}', space=vmem, size = 0x200, scoped, tag = 'scoped memory for tpu_custom_call.1']
  %s0 = inlined_call_operand.vmem [shape: f32[8,128], index: 0, kind: input, shape index: {}]
  %s1 = inlined_call_operand.vmem [shape: bf16[128,256], index: 1, kind: input, shape index: {}]
  %s2 = inlined_call_operand.vmem [shape: f32[1,256], index: 2, kind: input, shape index: {}]
  %s3 = inlined_call_operand.vmem [shape: bf16[256,32], index: 3, kind: input, shape index: {}]
  %s4 = inlined_call_operand.vmem [shape: f32[1,32], index: 4, kind: input, shape index: {}]
  %s5 = inlined_call_operand.vmem [shape: f32[8,32], index: 5, kind: input, shape index: {}]
  %s6 = inlined_call_operand.<no memory space> [shape: f32[1,1], index: 6, kind: input, shape index: {}]
  %s7 = inlined_call_operand.hbm [shape: f32[1,128], index: 7, kind: output, shape index: {}]
  %s8 = sld [smem:[#allocation0]]
  $region38: #{tpu_custom_call.1} parent=0
    _
  %s10 = ssub.s32 1, %s8
  %s11 = scalar_select 0, %s10, %s8
  %v12 = vstv %s6
  %13 = vst [vmem:[#allocation2] sm:$0x1] %v12
  $region1: #{tpu_custom_call.1} parent=0
    #allocation3 [shape = 'u8[512]{0}', space=vmem, size = 0x400, scoped, tag = 'output window, operand 0, single buffered']
    #allocation4 [shape = 's32[1]{0}', space=sflag, size = 0x4, scoped, tag = 'scoped memory for tpu_custom_call.1']
    %14 = vsyncpa [#allocation4], 0
    // Predicated region
    $region2: #{tpu_custom_call.1} parent=1 // pred_check
      _
    $region3: #{tpu_custom_call.1} parent=1 // pred_check_branch
      %16 = sbr.rel (0) target = $region5
    $region4: #{tpu_custom_call.1} parent=1 // pred_region
      _
    $region5: #{tpu_custom_call.1} parent=1 // pred_fallthru
      _
    // Predicated region
    $region6: #{tpu_custom_call.1} parent=1 // pred_check
      _
    $region7: #{tpu_custom_call.1} parent=1 // pred_check_branch
      %18 = sbr.rel (0) target = $region9
    $region8: #{tpu_custom_call.1} parent=1 // pred_region
      _
    $region9: #{tpu_custom_call.1} parent=1 // pred_fallthru
      _
    // Predicated region
    $region10: #{tpu_custom_call.1} parent=1 // pred_check
      _
    $region11: #{tpu_custom_call.1} parent=1 // pred_check_branch
      %20 = sbr.rel (0) target = $region13
    $region12: #{tpu_custom_call.1} parent=1 // pred_region
      _
    $region13: #{tpu_custom_call.1} parent=1 // pred_fallthru
      _
    // Predicated region
    $region14: #{tpu_custom_call.1} parent=1 // pred_check
      _
    $region15: #{tpu_custom_call.1} parent=1 // pred_check_branch
      %22 = sbr.rel (0) target = $region17
    $region16: #{tpu_custom_call.1} parent=1 // pred_region
      _
    $region17: #{tpu_custom_call.1} parent=1 // pred_fallthru
      _
    // Predicated region
    $region18: #{tpu_custom_call.1} parent=1 // pred_check
      _
    $region19: #{tpu_custom_call.1} parent=1 // pred_check_branch
      %24 = sbr.rel (0) target = $region21
    $region20: #{tpu_custom_call.1} parent=1 // pred_region
      _
    $region21: #{tpu_custom_call.1} parent=1 // pred_fallthru
      _
    // Predicated region
    $region22: #{tpu_custom_call.1} parent=1 // pred_check
      _
    $region23: #{tpu_custom_call.1} parent=1 // pred_check_branch
      %26 = sbr.rel (0) target = $region25
    $region24: #{tpu_custom_call.1} parent=1 // pred_region
      _
    $region25: #{tpu_custom_call.1} parent=1 // pred_fallthru
      _
    // Predicated region
    $region26: #{tpu_custom_call.1} parent=1 // pred_check
      _
    $region27: #{tpu_custom_call.1} parent=1 // pred_check_branch
      %28 = sbr.rel (0) target = $region29
    $region28: #{tpu_custom_call.1} parent=1 // pred_region
      _
    $region29: #{tpu_custom_call.1} parent=1 // pred_fallthru
      _
    %v30 = vld [vmem:[%s0] sm:$0xff]
    %v31 = vld [vmem:[%s0 + $0x8] sm:$0xff]
    %v32 = vld [vmem:[%s0 + $0x10] sm:$0xff]
    %v33 = vld [vmem:[%s0 + $0x18] sm:$0xff]
    %v34 = vld [vmem:[%s0 + $0x20] sm:$0xff]
    %v35 = vld [vmem:[%s0 + $0x28] sm:$0xff]
    %v36 = vld [vmem:[%s0 + $0x30] sm:$0xff]
    %v37 = vld [vmem:[%s0 + $0x38] sm:$0xff]
    %v38 = vld [vmem:[%s0 + $0x40] sm:$0xff]
    %v39 = vld [vmem:[%s0 + $0x48] sm:$0xff]
    %v40 = vld [vmem:[%s0 + $0x50] sm:$0xff]
    %v41 = vld [vmem:[%s0 + $0x58] sm:$0xff]
    %v42 = vld [vmem:[%s0 + $0x60] sm:$0xff]
    %v43 = vld [vmem:[%s0 + $0x68] sm:$0xff]
    %v44 = vld [vmem:[%s0 + $0x70] sm:$0xff]
    %v45 = vld [vmem:[%s0 + $0x78] sm:$0xff]
    %v46 = vpack.c.bf16 %v31, %v30
    %v47 = vpack.c.bf16 %v33, %v32
    %v48 = vpack.c.bf16 %v35, %v34
    %v49 = vpack.c.bf16 %v37, %v36
    %v50 = vpack.c.bf16 %v39, %v38
    %v51 = vpack.c.bf16 %v41, %v40
    %v52 = vpack.c.bf16 %v43, %v42
    %v53 = vpack.c.bf16 %v45, %v44
    %v54 = vld [vmem:[%s1] sm:$0xff]
    %v55 = vld [vmem:[%s1 + $0x8] sm:$0xff]
    %v56 = vld [vmem:[%s1 + $0x10] sm:$0xff]
    %v57 = vld [vmem:[%s1 + $0x18] sm:$0xff]
    %v58 = vld [vmem:[%s1 + $0x20] sm:$0xff]
    %v59 = vld [vmem:[%s1 + $0x28] sm:$0xff]
    %v60 = vld [vmem:[%s1 + $0x30] sm:$0xff]
    %v61 = vld [vmem:[%s1 + $0x38] sm:$0xff]
    %v62 = vld [vmem:[%s1 + $0x40] sm:$0xff]
    %v63 = vld [vmem:[%s1 + $0x48] sm:$0xff]
    %v64 = vld [vmem:[%s1 + $0x50] sm:$0xff]
    %v65 = vld [vmem:[%s1 + $0x58] sm:$0xff]
    %v66 = vld [vmem:[%s1 + $0x60] sm:$0xff]
    %v67 = vld [vmem:[%s1 + $0x68] sm:$0xff]
    %v68 = vld [vmem:[%s1 + $0x70] sm:$0xff]
    %v69 = vld [vmem:[%s1 + $0x78] sm:$0xff]
    %v70 = vld [vmem:[%s2] sm:$0x3]
    %v72 = vlaneseq
    %v73 = vshrl.u32 %v72, 7
    %v74 = vsub.s32 0, %v73
    %v75 = vrot.slane %v70, %v74
    %v76 = vlaneseq
    %v77 = vshrl.u32 %v76, 7
    %v78 = vsub.s32 1, %v77
    %v79 = vrot.slane %v70, %v78
    %v98 = vunpack.c.l.b16 %v54
    %v99 = vunpack.c.h.b16 %v54
    %v100 = vunpack.c.l.b16 %v55
    %v101 = vunpack.c.h.b16 %v55
    %v102 = vunpack.c.l.b16 %v56
    %v103 = vunpack.c.h.b16 %v56
    %v104 = vunpack.c.l.b16 %v57
    %v105 = vunpack.c.h.b16 %v57
    %v106 = vunpack.c.l.b16 %v58
    %v107 = vunpack.c.h.b16 %v58
    %v108 = vunpack.c.l.b16 %v59
    %v109 = vunpack.c.h.b16 %v59
    %v110 = vunpack.c.l.b16 %v60
    %v111 = vunpack.c.h.b16 %v60
    %v112 = vunpack.c.l.b16 %v61
    %v113 = vunpack.c.h.b16 %v61
    %v114 = vunpack.c.l.b16 %v62
    %v115 = vunpack.c.h.b16 %v62
    %v116 = vunpack.c.l.b16 %v63
    %v117 = vunpack.c.h.b16 %v63
    %v118 = vunpack.c.l.b16 %v64
    %v119 = vunpack.c.h.b16 %v64
    %v120 = vunpack.c.l.b16 %v65
    %v121 = vunpack.c.h.b16 %v65
    %v122 = vunpack.c.l.b16 %v66
    %v123 = vunpack.c.h.b16 %v66
    %v124 = vunpack.c.l.b16 %v67
    %v125 = vunpack.c.h.b16 %v67
    %v126 = vunpack.c.l.b16 %v68
    %v127 = vunpack.c.h.b16 %v68
    %v128 = vunpack.c.l.b16 %v69
    %v129 = vunpack.c.h.b16 %v69
    %v130 = vpack.c.b16 %v100, %v98
    %v131 = vpack.c.b16 %v101, %v99
    %v132 = vpack.c.b16 %v104, %v102
    %v133 = vpack.c.b16 %v105, %v103
    %v134 = vpack.c.b16 %v108, %v106
    %v135 = vpack.c.b16 %v109, %v107
    %v136 = vpack.c.b16 %v112, %v110
    %v137 = vpack.c.b16 %v113, %v111
    %v138 = vpack.c.b16 %v116, %v114
    %v139 = vpack.c.b16 %v117, %v115
    %v140 = vpack.c.b16 %v120, %v118
    %v141 = vpack.c.b16 %v121, %v119
    %v142 = vpack.c.b16 %v124, %v122
    %v143 = vpack.c.b16 %v125, %v123
    %v144 = vpack.c.b16 %v128, %v126
    %v145 = vpack.c.b16 %v129, %v127
    %162 = vmatprep.subr.bf16.mxu0 %v131
    %163 = vmatpush1.bf16.msra.mxu0 %v130
    %164 = vmatprep.subr.bf16.mxu0 %v133
    %165 = vmatpush1.bf16.msra.mxu0 %v132
    %166 = vmatprep.subr.bf16.mxu0 %v135
    %167 = vmatpush1.bf16.msra.mxu0 %v134
    %168 = vmatprep.subr.bf16.mxu0 %v137
    %169 = vmatpush1.bf16.msra.mxu0 %v136
    %170 = vmatprep.subr.bf16.mxu0 %v139
    %171 = vmatpush1.bf16.msra.mxu0 %v138
    %172 = vmatprep.subr.bf16.mxu0 %v141
    %173 = vmatpush1.bf16.msra.mxu0 %v140
    %174 = vmatprep.subr.bf16.mxu0 %v143
    %175 = vmatpush1.bf16.msra.mxu0 %v142
    %176 = vmatprep.subr.bf16.mxu0 %v145
    %177 = vmatpush1.bf16.msra.mxu0 %v144
    %178 = vmatprep.subr.bf16.mxu0 0
    %179 = vmatpush1.bf16.msra.mxu0 0
    %180 = vmatprep.subr.bf16.mxu0 0
    %181 = vmatpush1.bf16.msra.mxu0 0
    %182 = vmatprep.subr.bf16.mxu0 0
    %183 = vmatpush1.bf16.msra.mxu0 0
    %184 = vmatprep.subr.bf16.mxu0 0
    %185 = vmatpush1.bf16.msra.mxu0 0
    %186 = vmatprep.subr.bf16.mxu0 0
    %187 = vmatpush1.bf16.msra.mxu0 0
    %188 = vmatprep.subr.bf16.mxu0 0
    %189 = vmatpush1.bf16.msra.mxu0 0
    %190 = vmatprep.subr.bf16.mxu0 0
    %191 = vmatpush1.bf16.msra.mxu0 0
    %192 = vmatprep.subr.bf16.mxu0 0
    %193 = vmatpush1.bf16.msra.mxu0 0
    %194 = vmatprep.mubr.bf16.mxu0 0
    %195 = vmatmul.mubr.bf16.gmra.mrb[0].mxu0 %v46
    %v196 = vpop.f32.mrb[0].mxu0
    %v197 = vadd.f32 %v75, %v196
    %v198 = vpop.f32.mrb[0].mxu0
    %v199 = vadd.f32 %v79, %v198
    %v200 = vpop.f32.mrb[0].mxu0
    %v201 = vadd.f32 %v75, %v200
    %v202 = vpop.f32.mrb[0].mxu0
    %v203 = vadd.f32 %v79, %v202
    %204 = vmatprep.mubr.bf16.mxu0 0
    %205 = vmatmul.mubr.bf16.gmra.mrb[0].mxu0 %v47
    %v206 = vpop.f32.mrb[0].mxu0
    %v207 = vadd.f32 %v75, %v206
    %v208 = vpop.f32.mrb[0].mxu0
    %v209 = vadd.f32 %v79, %v208
    %v210 = vpop.f32.mrb[0].mxu0
    %v211 = vadd.f32 %v75, %v210
    %v212 = vpop.f32.mrb[0].mxu0
    %v213 = vadd.f32 %v79, %v212
    %214 = vmatprep.mubr.bf16.mxu0 0
    %215 = vmatmul.mubr.bf16.gmra.mrb[0].mxu0 %v48
    %v216 = vpop.f32.mrb[0].mxu0
    %v217 = vadd.f32 %v75, %v216
    %v218 = vpop.f32.mrb[0].mxu0
    %v219 = vadd.f32 %v79, %v218
    %v220 = vpop.f32.mrb[0].mxu0
    %v221 = vadd.f32 %v75, %v220
    %v222 = vpop.f32.mrb[0].mxu0
    %v223 = vadd.f32 %v79, %v222
    %224 = vmatprep.mubr.bf16.mxu0 0
    %225 = vmatmul.mubr.bf16.gmra.mrb[0].mxu0 %v49
    %v226 = vpop.f32.mrb[0].mxu0
    %v227 = vadd.f32 %v75, %v226
    %v228 = vpop.f32.mrb[0].mxu0
    %v229 = vadd.f32 %v79, %v228
    %v230 = vpop.f32.mrb[0].mxu0
    %v231 = vadd.f32 %v75, %v230
    %v232 = vpop.f32.mrb[0].mxu0
    %v233 = vadd.f32 %v79, %v232
    %234 = vmatprep.mubr.bf16.mxu0 0
    %235 = vmatmul.mubr.bf16.gmra.mrb[0].mxu0 %v50
    %v236 = vpop.f32.mrb[0].mxu0
    %v237 = vadd.f32 %v75, %v236
    %v238 = vpop.f32.mrb[0].mxu0
    %v239 = vadd.f32 %v79, %v238
    %v240 = vpop.f32.mrb[0].mxu0
    %v241 = vadd.f32 %v75, %v240
    %v242 = vpop.f32.mrb[0].mxu0
    %v243 = vadd.f32 %v79, %v242
    %244 = vmatprep.mubr.bf16.mxu0 0
    %245 = vmatmul.mubr.bf16.gmra.mrb[0].mxu0 %v51
    %v246 = vpop.f32.mrb[0].mxu0
    %v247 = vadd.f32 %v75, %v246
    %v248 = vpop.f32.mrb[0].mxu0
    %v249 = vadd.f32 %v79, %v248
    %v250 = vpop.f32.mrb[0].mxu0
    %v251 = vadd.f32 %v75, %v250
    %v252 = vpop.f32.mrb[0].mxu0
    %v253 = vadd.f32 %v79, %v252
    %254 = vmatprep.mubr.bf16.mxu0 0
    %255 = vmatmul.mubr.bf16.gmra.mrb[0].mxu0 %v52
    %v256 = vpop.f32.mrb[0].mxu0
    %v257 = vadd.f32 %v75, %v256
    %v258 = vpop.f32.mrb[0].mxu0
    %v259 = vadd.f32 %v79, %v258
    %v260 = vpop.f32.mrb[0].mxu0
    %v261 = vadd.f32 %v75, %v260
    %v262 = vpop.f32.mrb[0].mxu0
    %v263 = vadd.f32 %v79, %v262
    %264 = vmatprep.mubr.bf16.mxu0 0
    %265 = vmatmul.mubr.bf16.gmra.mrb[0].mxu0 %v53
    %v266 = vpop.f32.mrb[0].mxu0
    %v267 = vadd.f32 %v75, %v266
    %v268 = vpop.f32.mrb[0].mxu0
    %v269 = vadd.f32 %v79, %v268
    %v270 = vpop.f32.mrb[0].mxu0
    %v271 = vadd.f32 %v75, %v270
    %v272 = vpop.f32.mrb[0].mxu0
    %v273 = vadd.f32 %v79, %v272
    %274 = vdwg.mxu0
    %vm275 = vcmp.gt.f32.partialorder %v197, 0.0
    %vm276 = vcmp.gt.f32.partialorder %v199, 0.0
    %vm277 = vcmp.gt.f32.partialorder %v201, 0.0
    %vm278 = vcmp.gt.f32.partialorder %v203, 0.0
    %vm279 = vcmp.gt.f32.partialorder %v207, 0.0
    %vm280 = vcmp.gt.f32.partialorder %v209, 0.0
    %vm281 = vcmp.gt.f32.partialorder %v211, 0.0
    %vm282 = vcmp.gt.f32.partialorder %v213, 0.0
    %vm283 = vcmp.gt.f32.partialorder %v217, 0.0
    %vm284 = vcmp.gt.f32.partialorder %v219, 0.0
    %vm285 = vcmp.gt.f32.partialorder %v221, 0.0
    %vm286 = vcmp.gt.f32.partialorder %v223, 0.0
    %vm287 = vcmp.gt.f32.partialorder %v227, 0.0
    %vm288 = vcmp.gt.f32.partialorder %v229, 0.0
    %vm289 = vcmp.gt.f32.partialorder %v231, 0.0
    %vm290 = vcmp.gt.f32.partialorder %v233, 0.0
    %vm291 = vcmp.gt.f32.partialorder %v237, 0.0
    %vm292 = vcmp.gt.f32.partialorder %v239, 0.0
    %vm293 = vcmp.gt.f32.partialorder %v241, 0.0
    %vm294 = vcmp.gt.f32.partialorder %v243, 0.0
    %vm295 = vcmp.gt.f32.partialorder %v247, 0.0
    %vm296 = vcmp.gt.f32.partialorder %v249, 0.0
    %vm297 = vcmp.gt.f32.partialorder %v251, 0.0
    %vm298 = vcmp.gt.f32.partialorder %v253, 0.0
    %vm299 = vcmp.gt.f32.partialorder %v257, 0.0
    %vm300 = vcmp.gt.f32.partialorder %v259, 0.0
    %vm301 = vcmp.gt.f32.partialorder %v261, 0.0
    %vm302 = vcmp.gt.f32.partialorder %v263, 0.0
    %vm303 = vcmp.gt.f32.partialorder %v267, 0.0
    %vm304 = vcmp.gt.f32.partialorder %v269, 0.0
    %vm305 = vcmp.gt.f32.partialorder %v271, 0.0
    %vm306 = vcmp.gt.f32.partialorder %v273, 0.0
    %v307 = vmul.f32 %v197, 0.2
    %v308 = vmul.f32 %v199, 0.2
    %v309 = vmul.f32 %v201, 0.2
    %v310 = vmul.f32 %v203, 0.2
    %v311 = vmul.f32 %v207, 0.2
    %v312 = vmul.f32 %v209, 0.2
    %v313 = vmul.f32 %v211, 0.2
    %v314 = vmul.f32 %v213, 0.2
    %v315 = vmul.f32 %v217, 0.2
    %v316 = vmul.f32 %v219, 0.2
    %v317 = vmul.f32 %v221, 0.2
    %v318 = vmul.f32 %v223, 0.2
    %v319 = vmul.f32 %v227, 0.2
    %v320 = vmul.f32 %v229, 0.2
    %v321 = vmul.f32 %v231, 0.2
    %v322 = vmul.f32 %v233, 0.2
    %v323 = vmul.f32 %v237, 0.2
    %v324 = vmul.f32 %v239, 0.2
    %v325 = vmul.f32 %v241, 0.2
    %v326 = vmul.f32 %v243, 0.2
    %v327 = vmul.f32 %v247, 0.2
    %v328 = vmul.f32 %v249, 0.2
    %v329 = vmul.f32 %v251, 0.2
    %v330 = vmul.f32 %v253, 0.2
    %v331 = vmul.f32 %v257, 0.2
    %v332 = vmul.f32 %v259, 0.2
    %v333 = vmul.f32 %v261, 0.2
    %v334 = vmul.f32 %v263, 0.2
    %v335 = vmul.f32 %v267, 0.2
    %v336 = vmul.f32 %v269, 0.2
    %v337 = vmul.f32 %v271, 0.2
    %v338 = vmul.f32 %v273, 0.2
    %v339 = vsel %vm275, %v197, %v307
    %v340 = vsel %vm276, %v199, %v308
    %v341 = vsel %vm277, %v201, %v309
    %v342 = vsel %vm278, %v203, %v310
    %v343 = vsel %vm279, %v207, %v311
    %v344 = vsel %vm280, %v209, %v312
    %v345 = vsel %vm281, %v211, %v313
    %v346 = vsel %vm282, %v213, %v314
    %v347 = vsel %vm283, %v217, %v315
    %v348 = vsel %vm284, %v219, %v316
    %v349 = vsel %vm285, %v221, %v317
    %v350 = vsel %vm286, %v223, %v318
    %v351 = vsel %vm287, %v227, %v319
    %v352 = vsel %vm288, %v229, %v320
    %v353 = vsel %vm289, %v231, %v321
    %v354 = vsel %vm290, %v233, %v322
    %v355 = vsel %vm291, %v237, %v323
    %v356 = vsel %vm292, %v239, %v324
    %v357 = vsel %vm293, %v241, %v325
    %v358 = vsel %vm294, %v243, %v326
    %v359 = vsel %vm295, %v247, %v327
    %v360 = vsel %vm296, %v249, %v328
    %v361 = vsel %vm297, %v251, %v329
    %v362 = vsel %vm298, %v253, %v330
    %v363 = vsel %vm299, %v257, %v331
    %v364 = vsel %vm300, %v259, %v332
    %v365 = vsel %vm301, %v261, %v333
    %v366 = vsel %vm302, %v263, %v334
    %v367 = vsel %vm303, %v267, %v335
    %v368 = vsel %vm304, %v269, %v336
    %v369 = vsel %vm305, %v271, %v337
    %v370 = vsel %vm306, %v273, %v338
    %v371 = vpack.c.bf16 %v341, %v339
    %v372 = vpack.c.bf16 %v342, %v340
    %v373 = vpack.c.bf16 %v345, %v343
    %v374 = vpack.c.bf16 %v346, %v344
    %v375 = vpack.c.bf16 %v349, %v347
    %v376 = vpack.c.bf16 %v350, %v348
    %v377 = vpack.c.bf16 %v353, %v351
    %v378 = vpack.c.bf16 %v354, %v352
    %v379 = vpack.c.bf16 %v357, %v355
    %v380 = vpack.c.bf16 %v358, %v356
    %v381 = vpack.c.bf16 %v361, %v359
    %v382 = vpack.c.bf16 %v362, %v360
    %v383 = vpack.c.bf16 %v365, %v363
    %v384 = vpack.c.bf16 %v366, %v364
    %v385 = vpack.c.bf16 %v369, %v367
    %v386 = vpack.c.bf16 %v370, %v368
    %v387 = vld [vmem:[%s3] sm:$0xf]
    %v388 = vld [vmem:[%s3 + $0x4] sm:$0xf]
    %v389 = vld [vmem:[%s3 + $0x8] sm:$0xf]
    %v390 = vld [vmem:[%s3 + $0xc] sm:$0xf]
    %v391 = vld [vmem:[%s3 + $0x10] sm:$0xf]
    %v392 = vld [vmem:[%s3 + $0x14] sm:$0xf]
    %v393 = vld [vmem:[%s3 + $0x18] sm:$0xf]
    %v394 = vld [vmem:[%s3 + $0x1c] sm:$0xf]
    %v395 = vld [vmem:[%s3 + $0x20] sm:$0xf]
    %v396 = vld [vmem:[%s3 + $0x24] sm:$0xf]
    %v397 = vld [vmem:[%s3 + $0x28] sm:$0xf]
    %v398 = vld [vmem:[%s3 + $0x2c] sm:$0xf]
    %v399 = vld [vmem:[%s3 + $0x30] sm:$0xf]
    %v400 = vld [vmem:[%s3 + $0x34] sm:$0xf]
    %v401 = vld [vmem:[%s3 + $0x38] sm:$0xf]
    %v402 = vld [vmem:[%s3 + $0x3c] sm:$0xf]
    %v403 = vld [vmem:[%s3 + $0x40] sm:$0xf]
    %v404 = vld [vmem:[%s3 + $0x44] sm:$0xf]
    %v405 = vld [vmem:[%s3 + $0x48] sm:$0xf]
    %v406 = vld [vmem:[%s3 + $0x4c] sm:$0xf]
    %v407 = vld [vmem:[%s3 + $0x50] sm:$0xf]
    %v408 = vld [vmem:[%s3 + $0x54] sm:$0xf]
    %v409 = vld [vmem:[%s3 + $0x58] sm:$0xf]
    %v410 = vld [vmem:[%s3 + $0x5c] sm:$0xf]
    %v411 = vld [vmem:[%s3 + $0x60] sm:$0xf]
    %v412 = vld [vmem:[%s3 + $0x64] sm:$0xf]
    %v413 = vld [vmem:[%s3 + $0x68] sm:$0xf]
    %v414 = vld [vmem:[%s3 + $0x6c] sm:$0xf]
    %v415 = vld [vmem:[%s3 + $0x70] sm:$0xf]
    %v416 = vld [vmem:[%s3 + $0x74] sm:$0xf]
    %v417 = vld [vmem:[%s3 + $0x78] sm:$0xf]
    %v418 = vld [vmem:[%s3 + $0x7c] sm:$0xf]
    %v419 = vld [vmem:[%s4] sm:$0x1]
    %v421 = vlaneseq
    %v422 = vshrl.u32 %v421, 7
    %v423 = vsub.s32 0, %v422
    %v424 = vrot.slane %v419, %v423
    %v458 = vunpack.c.l.b16 %v387
    %v459 = vunpack.c.l.b16 %v388
    %v460 = vunpack.c.l.b16 %v389
    %v461 = vunpack.c.l.b16 %v390
    %v462 = vunpack.c.l.b16 %v391
    %v463 = vunpack.c.l.b16 %v392
    %v464 = vunpack.c.l.b16 %v393
    %v465 = vunpack.c.l.b16 %v394
    %v466 = vunpack.c.l.b16 %v395
    %v467 = vunpack.c.l.b16 %v396
    %v468 = vunpack.c.l.b16 %v397
    %v469 = vunpack.c.l.b16 %v398
    %v470 = vunpack.c.l.b16 %v399
    %v471 = vunpack.c.l.b16 %v400
    %v472 = vunpack.c.l.b16 %v401
    %v473 = vunpack.c.l.b16 %v402
    %v474 = vunpack.c.l.b16 %v403
    %v475 = vunpack.c.l.b16 %v404
    %v476 = vunpack.c.l.b16 %v405
    %v477 = vunpack.c.l.b16 %v406
    %v478 = vunpack.c.l.b16 %v407
    %v479 = vunpack.c.l.b16 %v408
    %v480 = vunpack.c.l.b16 %v409
    %v481 = vunpack.c.l.b16 %v410
    %v482 = vunpack.c.l.b16 %v411
    %v483 = vunpack.c.l.b16 %v412
    %v484 = vunpack.c.l.b16 %v413
    %v485 = vunpack.c.l.b16 %v414
    %v486 = vunpack.c.l.b16 %v415
    %v487 = vunpack.c.l.b16 %v416
    %v488 = vunpack.c.l.b16 %v417
    %v489 = vunpack.c.l.b16 %v418
    %v490 = vpack.c.b16 %v459, %v458
    %v491 = vpack.c.b16 %v461, %v460
    %v492 = vpack.c.b16 %v463, %v462
    %v493 = vpack.c.b16 %v465, %v464
    %v494 = vpack.c.b16 %v467, %v466
    %v495 = vpack.c.b16 %v469, %v468
    %v496 = vpack.c.b16 %v471, %v470
    %v497 = vpack.c.b16 %v473, %v472
    %v498 = vpack.c.b16 %v475, %v474
    %v499 = vpack.c.b16 %v477, %v476
    %v500 = vpack.c.b16 %v479, %v478
    %v501 = vpack.c.b16 %v481, %v480
    %v502 = vpack.c.b16 %v483, %v482
    %v503 = vpack.c.b16 %v485, %v484
    %v504 = vpack.c.b16 %v487, %v486
    %v505 = vpack.c.b16 %v489, %v488
    %522 = vmatprep.subr.bf16.mxu0 0
    %523 = vmatpush1.bf16.msra.mxu0 %v490
    %524 = vmatprep.subr.bf16.mxu0 0
    %525 = vmatpush1.bf16.msra.mxu0 %v491
    %526 = vmatprep.subr.bf16.mxu0 0
    %527 = vmatpush1.bf16.msra.mxu0 %v492
    %528 = vmatprep.subr.bf16.mxu0 0
    %529 = vmatpush1.bf16.msra.mxu0 %v493
    %530 = vmatprep.subr.bf16.mxu0 0
    %531 = vmatpush1.bf16.msra.mxu0 %v494
    %532 = vmatprep.subr.bf16.mxu0 0
    %533 = vmatpush1.bf16.msra.mxu0 %v495
    %534 = vmatprep.subr.bf16.mxu0 0
    %535 = vmatpush1.bf16.msra.mxu0 %v496
    %536 = vmatprep.subr.bf16.mxu0 0
    %537 = vmatpush1.bf16.msra.mxu0 %v497
    %538 = vmatprep.subr.bf16.mxu0 0
    %539 = vmatpush1.bf16.msra.mxu0 %v498
    %540 = vmatprep.subr.bf16.mxu0 0
    %541 = vmatpush1.bf16.msra.mxu0 %v499
    %542 = vmatprep.subr.bf16.mxu0 0
    %543 = vmatpush1.bf16.msra.mxu0 %v500
    %544 = vmatprep.subr.bf16.mxu0 0
    %545 = vmatpush1.bf16.msra.mxu0 %v501
    %546 = vmatprep.subr.bf16.mxu0 0
    %547 = vmatpush1.bf16.msra.mxu0 %v502
    %548 = vmatprep.subr.bf16.mxu0 0
    %549 = vmatpush1.bf16.msra.mxu0 %v503
    %550 = vmatprep.subr.bf16.mxu0 0
    %551 = vmatpush1.bf16.msra.mxu0 %v504
    %552 = vmatprep.subr.bf16.mxu0 0
    %553 = vmatpush1.bf16.msra.mxu0 %v505
    %554 = vmatprep.mubr.bf16.mxu0 %v372
    %555 = vmatmul.mubr.bf16.gmra.mrb[0].mxu0 %v371
    %v556 = vpop.f32.mrb[0].mxu0
    %v557 = vadd.f32 %v424, %v556
    %v558 = vpop.f32.mrb[0].mxu0
    %v559 = vpop.f32.mrb[0].mxu0
    %v560 = vadd.f32 %v424, %v559
    %v561 = vpop.f32.mrb[0].mxu0
    %562 = vmatprep.mubr.bf16.mxu0 %v374
    %563 = vmatmul.mubr.bf16.gmra.mrb[0].mxu0 %v373
    %v564 = vpop.f32.mrb[0].mxu0
    %v565 = vadd.f32 %v424, %v564
    %v566 = vpop.f32.mrb[0].mxu0
    %v567 = vpop.f32.mrb[0].mxu0
    %v568 = vadd.f32 %v424, %v567
    %v569 = vpop.f32.mrb[0].mxu0
    %570 = vmatprep.mubr.bf16.mxu0 %v376
    %571 = vmatmul.mubr.bf16.gmra.mrb[0].mxu0 %v375
    %v572 = vpop.f32.mrb[0].mxu0
    %v573 = vadd.f32 %v424, %v572
    %v574 = vpop.f32.mrb[0].mxu0
    %v575 = vpop.f32.mrb[0].mxu0
    %v576 = vadd.f32 %v424, %v575
    %v577 = vpop.f32.mrb[0].mxu0
    %578 = vmatprep.mubr.bf16.mxu0 %v378
    %579 = vmatmul.mubr.bf16.gmra.mrb[0].mxu0 %v377
    %v580 = vpop.f32.mrb[0].mxu0
    %v581 = vadd.f32 %v424, %v580
    %v582 = vpop.f32.mrb[0].mxu0
    %v583 = vpop.f32.mrb[0].mxu0
    %v584 = vadd.f32 %v424, %v583
    %v585 = vpop.f32.mrb[0].mxu0
    %586 = vmatprep.mubr.bf16.mxu0 %v380
    %587 = vmatmul.mubr.bf16.gmra.mrb[0].mxu0 %v379
    %v588 = vpop.f32.mrb[0].mxu0
    %v589 = vadd.f32 %v424, %v588
    %v590 = vpop.f32.mrb[0].mxu0
    %v591 = vpop.f32.mrb[0].mxu0
    %v592 = vadd.f32 %v424, %v591
    %v593 = vpop.f32.mrb[0].mxu0
    %594 = vmatprep.mubr.bf16.mxu0 %v382
    %595 = vmatmul.mubr.bf16.gmra.mrb[0].mxu0 %v381
    %v596 = vpop.f32.mrb[0].mxu0
    %v597 = vadd.f32 %v424, %v596
    %v598 = vpop.f32.mrb[0].mxu0
    %v599 = vpop.f32.mrb[0].mxu0
    %v600 = vadd.f32 %v424, %v599
    %v601 = vpop.f32.mrb[0].mxu0
    %602 = vmatprep.mubr.bf16.mxu0 %v384
    %603 = vmatmul.mubr.bf16.gmra.mrb[0].mxu0 %v383
    %v604 = vpop.f32.mrb[0].mxu0
    %v605 = vadd.f32 %v424, %v604
    %v606 = vpop.f32.mrb[0].mxu0
    %v607 = vpop.f32.mrb[0].mxu0
    %v608 = vadd.f32 %v424, %v607
    %v609 = vpop.f32.mrb[0].mxu0
    %610 = vmatprep.mubr.bf16.mxu0 %v386
    %611 = vmatmul.mubr.bf16.gmra.mrb[0].mxu0 %v385
    %v612 = vpop.f32.mrb[0].mxu0
    %v613 = vadd.f32 %v424, %v612
    %v614 = vpop.f32.mrb[0].mxu0
    %v615 = vpop.f32.mrb[0].mxu0
    %v616 = vadd.f32 %v424, %v615
    %v617 = vpop.f32.mrb[0].mxu0
    %618 = vdwg.mxu0
    %vm619 = vcmp.gt.f32.partialorder %v557, 0.0
    %vm620 = vcmp.gt.f32.partialorder %v560, 0.0
    %vm621 = vcmp.gt.f32.partialorder %v565, 0.0
    %vm622 = vcmp.gt.f32.partialorder %v568, 0.0
    %vm623 = vcmp.gt.f32.partialorder %v573, 0.0
    %vm624 = vcmp.gt.f32.partialorder %v576, 0.0
    %vm625 = vcmp.gt.f32.partialorder %v581, 0.0
    %vm626 = vcmp.gt.f32.partialorder %v584, 0.0
    %vm627 = vcmp.gt.f32.partialorder %v589, 0.0
    %vm628 = vcmp.gt.f32.partialorder %v592, 0.0
    %vm629 = vcmp.gt.f32.partialorder %v597, 0.0
    %vm630 = vcmp.gt.f32.partialorder %v600, 0.0
    %vm631 = vcmp.gt.f32.partialorder %v605, 0.0
    %vm632 = vcmp.gt.f32.partialorder %v608, 0.0
    %vm633 = vcmp.gt.f32.partialorder %v613, 0.0
    %vm634 = vcmp.gt.f32.partialorder %v616, 0.0
    %v635 = vmul.f32 %v557, 0.2
    %v636 = vmul.f32 %v560, 0.2
    %v637 = vmul.f32 %v565, 0.2
    %v638 = vmul.f32 %v568, 0.2
    %v639 = vmul.f32 %v573, 0.2
    %v640 = vmul.f32 %v576, 0.2
    %v641 = vmul.f32 %v581, 0.2
    %v642 = vmul.f32 %v584, 0.2
    %v643 = vmul.f32 %v589, 0.2
    %v644 = vmul.f32 %v592, 0.2
    %v645 = vmul.f32 %v597, 0.2
    %v646 = vmul.f32 %v600, 0.2
    %v647 = vmul.f32 %v605, 0.2
    %v648 = vmul.f32 %v608, 0.2
    %v649 = vmul.f32 %v613, 0.2
    %v650 = vmul.f32 %v616, 0.2
    %v651 = vsel %vm619, %v557, %v635
    %v652 = vsel %vm620, %v560, %v636
    %v653 = vsel %vm621, %v565, %v637
    %v654 = vsel %vm622, %v568, %v638
    %v655 = vsel %vm623, %v573, %v639
    %v656 = vsel %vm624, %v576, %v640
    %v657 = vsel %vm625, %v581, %v641
    %v658 = vsel %vm626, %v584, %v642
    %v659 = vsel %vm627, %v589, %v643
    %v660 = vsel %vm628, %v592, %v644
    %v661 = vsel %vm629, %v597, %v645
    %v662 = vsel %vm630, %v600, %v646
    %v663 = vsel %vm631, %v605, %v647
    %v664 = vsel %vm632, %v608, %v648
    %v665 = vsel %vm633, %v613, %v649
    %v666 = vsel %vm634, %v616, %v650
    %v667 = vld [vmem:[%s5] sm:$0xff]
    %vm668 = vcmask 261120
    %v670 = vsel %vm668, %v667, 0
    %v673 = vsel %vm668, %v651, 0
    %v676 = vsel %vm668, %v652, 0
    %v679 = vsel %vm668, %v653, 0
    %v682 = vsel %vm668, %v654, 0
    %v685 = vsel %vm668, %v655, 0
    %v688 = vsel %vm668, %v656, 0
    %v691 = vsel %vm668, %v657, 0
    %v694 = vsel %vm668, %v658, 0
    %v697 = vsel %vm668, %v659, 0
    %v700 = vsel %vm668, %v660, 0
    %v703 = vsel %vm668, %v661, 0
    %v706 = vsel %vm668, %v662, 0
    %v709 = vsel %vm668, %v663, 0
    %v712 = vsel %vm668, %v664, 0
    %v715 = vsel %vm668, %v665, 0
    %v718 = vsel %vm668, %v666, 0
    %720 = vmatprep.subr.mxu0 0.0
    %721 = vmatpush1.xpose.msra.mxu0 %v673
    %722 = vmatprep.subr.mxu0 0.0
    %723 = vmatpush1.xpose.msra.mxu0 %v676
    %724 = vmatprep.subr.mxu0 0.0
    %725 = vmatpush1.xpose.msra.mxu0 %v679
    %726 = vmatprep.subr.mxu0 0.0
    %727 = vmatpush1.xpose.msra.mxu0 %v682
    %728 = vmatprep.subr.mxu0 0.0
    %729 = vmatpush1.xpose.msra.mxu0 %v685
    %730 = vmatprep.subr.mxu0 0.0
    %731 = vmatpush1.xpose.msra.mxu0 %v688
    %732 = vmatprep.subr.mxu0 0.0
    %733 = vmatpush1.xpose.msra.mxu0 %v691
    %734 = vmatprep.subr.mxu0 0.0
    %735 = vmatpush1.xpose.msra.mxu0 %v694
    %736 = vmatprep.subr.mxu0 0.0
    %737 = vmatpush1.xpose.msra.mxu0 %v697
    %738 = vmatprep.subr.mxu0 0.0
    %739 = vmatpush1.xpose.msra.mxu0 %v700
    %740 = vmatprep.subr.mxu0 0.0
    %741 = vmatpush1.xpose.msra.mxu0 %v703
    %742 = vmatprep.subr.mxu0 0.0
    %743 = vmatpush1.xpose.msra.mxu0 %v706
    %744 = vmatprep.subr.mxu0 0.0
    %745 = vmatpush1.xpose.msra.mxu0 %v709
    %746 = vmatprep.subr.mxu0 0.0
    %747 = vmatpush1.xpose.msra.mxu0 %v712
    %748 = vmatprep.subr.mxu0 0.0
    %749 = vmatpush1.xpose.msra.mxu0 %v715
    %750 = vmatprep.subr.mxu0 0.0
    %751 = vmatpush1.xpose.msra.mxu0 %v718
    %752 = vmatprep.subr.mxu0 0.0
    %753 = vmatpush1.xpose.msra.mxu0 0.0
    %754 = vmatprep.subr.mxu0 0.0
    %755 = vmatpush1.xpose.msra.mxu0 0.0
    %756 = vmatprep.subr.mxu0 0.0
    %757 = vmatpush1.xpose.msra.mxu0 0.0
    %758 = vmatprep.subr.mxu0 0.0
    %759 = vmatpush1.xpose.msra.mxu0 0.0
    %760 = vmatprep.subr.mxu0 0.0
    %761 = vmatpush1.xpose.msra.mxu0 0.0
    %762 = vmatprep.subr.mxu0 0.0
    %763 = vmatpush1.xpose.msra.mxu0 0.0
    %764 = vmatprep.subr.mxu0 0.0
    %765 = vmatpush1.xpose.msra.mxu0 0.0
    %766 = vmatprep.subr.mxu0 0.0
    %767 = vmatpush1.xpose.msra.mxu0 0.0
    %768 = vmatprep.subr.mxu0 0.0
    %769 = vmatpush1.xpose.msra.mxu0 0.0
    %770 = vmatprep.subr.mxu0 0.0
    %771 = vmatpush1.xpose.msra.mxu0 0.0
    %772 = vmatprep.subr.mxu0 0.0
    %773 = vmatpush1.xpose.msra.mxu0 0.0
    %774 = vmatprep.subr.mxu0 0.0
    %775 = vmatpush1.xpose.msra.mxu0 0.0
    %776 = vmatprep.subr.mxu0 0.0
    %777 = vmatpush1.xpose.msra.mxu0 0.0
    %778 = vmatprep.subr.mxu0 0.0
    %779 = vmatpush1.xpose.msra.mxu0 0.0
    %780 = vmatprep.subr.mxu0 0.0
    %781 = vmatpush1.xpose.msra.mxu0 0.0
    %782 = vmatprep.subr.mxu0 0.0
    %783 = vmatpush1.xpose.msra.mxu0 0.0
    %784 = vmatprep.mubr.f32.mxu0 0.0
    %785 = vmatmul.mubr.f32.gmra.mrb[0].mxu0 %v670
    %v786 = vpop.f32.mrb[0].mxu0
    %v787 = vadd.f32 0.0, %v786
    %v788 = vpop.f32.mrb[0].mxu0
    %789 = vdwg.mxu0
    %v790 = vld [vmem:[#allocation2] sm:$0x1]
    %792 = vset.pattern.permute.xlu0 0
    %793 = vperm.xlu0 %792, %v790
    %v794 = vpop.permute.xlu0 %793
    %v796 = vlaneseq
    %v797 = vshrl.u32 %v796, 7
    %v798 = vsub.s32 0, %v797
    %v799 = vrot.slane %v794, %v798
    %v800 = vadd.f32 %v787, %v799
    %801 = vst [vmem:[#allocation3] sm:$0x1] %v800
    // Predicated region
    $region30: #{tpu_custom_call.1} parent=1 // pred_check
      _
    $region31: #{tpu_custom_call.1} parent=1 // pred_check_branch
      %803 = sbr.rel (0) target = $region33
    $region32: #{tpu_custom_call.1} parent=1 // pred_region
      %s805 = ssub.s32 16, 16
      %806 = vsyncadd [#allocation4], %s805
      %s808 = sshll.u32 [#allocation3], 4
      %s809 = int_to_ptr.vmem [resolvable:$true] %s808
      %811 = dma.vmem_to_hbm [thread:$0]  %s809, 16, %s7, [#allocation4]
    $region33: #{tpu_custom_call.1} parent=1 // pred_fallthru
      _
    // Predicated region
    $region34: #{tpu_custom_call.1} parent=1 // pred_check
      _
    $region35: #{tpu_custom_call.1} parent=1 // pred_check_branch
      %813 = sbr.rel (0) target = $region37
    $region36: #{tpu_custom_call.1} parent=1 // pred_region
      %814 = dma.done [#allocation4], 16
    $region37: #{tpu_custom_call.1} parent=1 // pred_fallthru
      _
    %815 = vsyncpa [#allocation4], 1

</llo_original>
